<compile_context>
chip_gen: v7x
topology: tpu7x:2x2x1
jax: 0.10.0
libtpu: 0.0.40
codegen_flags: <defaults>
</compile_context>

<pallas_src>
import functools

import jax
import jax.numpy as jnp
from jax.experimental import pallas as pl
from jax.experimental.pallas import tpu as pltpu

_LANE = 128
_MAX_LANE_TILE = 8192                  # HBM roofline is flat beyond ~2K lanes
_LANE_TARGET = 512                     # ~85% of roofline in measured tile sweeps
_STEP_TARGET_BYTES = 2 * 1024 * 1024   # amortize per-grid-step overhead


def _round_up(v, m):
    return -(-v // m) * m


def _hloss_kernel(x_ref, o_ref, acc_ref, *, tc, c_total, compute_dtype, needs_c_mask):
    # x_ref: (Tb, tc, tile_hw)  o_ref: (Tb, 1, tile_hw)  acc_ref: (Tb, 1, tile_hw) f32
    k = pl.program_id(2)

    @pl.when(k == 0)
    def _init():
        acc_ref[...] = jnp.zeros_like(acc_ref)

    x = x_ref[...].astype(compute_dtype)   # exp on EUP, mul on VPU
    b = jnp.exp(x) * x
    if needs_c_mask:                        # ragged last C block (large-C path only)
        cid = jax.lax.broadcasted_iota(jnp.int32, b.shape, dimension=1) + k * tc
        b = jnp.where(cid < c_total, b, jnp.zeros_like(b))
    # cross-channel reduce over sublanes (XLU); accumulate in f32
    acc_ref[...] += jnp.sum(b.astype(jnp.float32), axis=1, keepdims=True)

    @pl.when(k == pl.num_programs(2) - 1)
    def _finalize():
        o_ref[...] = (-acc_ref[...]).astype(o_ref.dtype)


def _vmem_policy():
    """Per-generation VMEM ceiling / working budget + bf16-compute capability."""
    cap = None
    kind = ""
    try:
        cap = int(getattr(pltpu.get_tpu_info(), "vmem_capacity_bytes", 0)) or None
    except Exception:
        cap = None
    try:
        kind = jax.devices()[0].device_kind.lower()
    except Exception:
        kind = ""
    is_v7 = ("v7" in kind) or ("7x" in kind)
    big_vmem = (cap is not None) and (cap >= 128 * 1024 * 1024) and not is_v7
    ceiling = 96 * 1024 * 1024 if big_vmem else 48 * 1024 * 1024   # v5e/v6e vs v7x/unknown
    budget = ceiling - 12 * 1024 * 1024                            # headroom for internal scratch
    bf16_ok = ("v6" in kind) or is_v7
    return ceiling, budget, bf16_ok


def hloss(x):
    """x: (B, C, H, W) -> (B, H, W) with out[b,h,w] = -sum_c exp(x[b,c,h,w]) * x[b,c,h,w]."""
    B, C, H, W = x.shape
    HW = H * W
    itemsize = jnp.dtype(x.dtype).itemsize
    sub = max(8, 32 // itemsize)            # sublane granularity: 8 f32 / 16 bf16 / 32 i8

    ceiling, budget, bf16_ok = _vmem_policy()
    compute_dtype = x.dtype if (x.dtype == jnp.bfloat16 and bf16_ok) else jnp.float32

    # ---- lane (spatial) tile ------------------------------------------------
    if HW % _LANE == 0:
        lane_cap = HW
    elif HW > _LANE:
        lane_cap = (HW // _LANE) * _LANE    # ragged last block handled by Pallas
    else:
        lane_cap = HW                       # block == full dim when HW < 128
    lane_cap = min(lane_cap, _MAX_LANE_TILE)
    lane_target = min(_LANE_TARGET, lane_cap)

    # VMEM bytes per lane-column of one batch row (2x-buffered in/out + f32 acc),
    # including sublane padding of the layout.
    def per_lane_bytes(rows):
        return (2 * _round_up(rows, sub) * itemsize   # input block, double-buffered
                + 2 * sub * itemsize                  # output row, double-buffered
                + sub * 4)                            # f32 accumulator row

    # ---- channel tiling decision ---------------------------------------------
    if per_lane_bytes(C) * max(lane_target, 1) <= budget:
        tc = C                               # common case: whole C in one block
        if lane_cap < _LANE:
            tile_hw = lane_cap
        else:
            tile_hw = max(_LANE, min(lane_cap,
                                     (budget // per_lane_bytes(C)) // _LANE * _LANE))
    else:
        # very large C: keep lanes wide, tile the channel axis instead
        tile_hw = lane_target
        avail = budget - (2 * sub * itemsize + sub * 4) * tile_hw
        rows = max(sub, (avail // (2 * itemsize * tile_hw)) // sub * sub)
        tc = int(min(rows, C))

    # ---- batch tile: amortize per-step overhead for small C*HW ---------------
    row_fp = per_lane_bytes(tc) * tile_hw
    in_row_bytes = tc * tile_hw * itemsize
    tb = min(B,
             max(1, budget // max(1, row_fp)),
             max(1, _STEP_TARGET_BYTES // max(1, in_row_bytes)))
    tb = int(max(1, tb))

    # ---- guarantee >=2 parallel grid steps (dual-TC chips) -------------------
    gb = pl.cdiv(B, tb)
    gj = pl.cdiv(HW, tile_hw)
    if gb * gj < 2:
        if B >= 2:
            tb = _round_up(B, 2) // 2
            gb = pl.cdiv(B, tb)
        elif tile_hw >= 2 * _LANE:
            tile_hw = max(_LANE, (tile_hw // 2) // _LANE * _LANE)
            gj = pl.cdiv(HW, tile_hw)
    gk = pl.cdiv(C, tc)

    # ---- VMEM limit tracks the real footprint (never clamps below it) --------
    footprint = per_lane_bytes(tc) * tile_hw * tb
    vmem_limit = int(min(ceiling, max(footprint + 8 * 1024 * 1024, 16 * 1024 * 1024)))
    vmem_limit = int(max(vmem_limit, footprint + 2 * 1024 * 1024))

    kernel = functools.partial(
        _hloss_kernel, tc=tc, c_total=C, compute_dtype=compute_dtype,
        needs_c_mask=(C % tc != 0))

    x2 = x.reshape(B, C, HW)   # free, contiguous reshape — no padded copy
    out = pl.pallas_call(
        kernel,
        out_shape=jax.ShapeDtypeStruct((B, 1, HW), x.dtype),
        grid_spec=pltpu.PrefetchScalarGridSpec(
            num_scalar_prefetch=0,
            grid=(gb, gj, gk),
            in_specs=[pl.BlockSpec((tb, tc, tile_hw), lambda b, j, k: (b, k, j))],
            out_specs=pl.BlockSpec((tb, 1, tile_hw), lambda b, j, k: (b, 0, j)),
            scratch_shapes=[pltpu.VMEM((tb, 1, tile_hw), jnp.float32)],
        ),
        compiler_params=pltpu.CompilerParams(
            dimension_semantics=("parallel", "parallel", "arbitrary"),
            vmem_limit_bytes=vmem_limit,
        ),
    )(x2)

    return out[:, 0, :].reshape(B, H, W)


def _hloss_ref(x):
    # pure-JAX reference of the PyTorch forward
    b = jnp.exp(x) * x
    return -1.0 * jnp.sum(b, axis=1)


if __name__ == "__main__":
    key = jax.random.PRNGKey(0)
    x = jax.random.normal(key, (2, 4, 16, 16), dtype=jnp.float32)

    out = hloss(x)
    jax.block_until_ready(out)

    ref = _hloss_ref(x)
    assert out.shape == ref.shape == (2, 16, 16)
    assert jnp.allclose(out, ref, atol=1e-5, rtol=1e-5)

    print("KERNEL_OK")
</pallas_src>

<mosaic_0001>
module attributes {stable_mosaic.version = 11 : i64} {
  func.func @_hloss_kernel(%arg0: i32, %arg1: i32, %arg2: i32, %arg3: memref<1x4x256xf32, #tpu.memory_space<vmem>>, %arg4: memref<1x1x256xf32, #tpu.memory_space<vmem>>, %arg5: memref<1x1x256xf32, #tpu.memory_space<vmem>>) attributes {dimension_semantics = [#tpu.dimension_semantics<parallel>, #tpu.dimension_semantics<parallel>, #tpu.dimension_semantics<arbitrary>], iteration_bounds = array<i64: 2, 1, 1>, scalar_prefetch = 0 : i64, scratch_operands = 1 : i64, tpu.core_type = #tpu.core_type<tc>, window_params = [{transform_indices = @transform_0, window_bounds = array<i64: 1, 4, 256>}, {transform_indices = @transform_1, window_bounds = array<i64: 1, 1, 256>}]} {
    %c0_i32 = arith.constant 0 : i32
    %0 = arith.cmpi eq, %arg2, %c0_i32 : i32
    %1 = arith.extui %0 : i1 to i32
    %c0_i32_0 = arith.constant 0 : i32
    %2 = arith.cmpi ne, %1, %c0_i32_0 : i32
    scf.if %2 {
      %cst_11 = arith.constant 0.000000e+00 : f32
      %14 = vector.broadcast %cst_11 : f32 to vector<1x1x256xf32>
      %c0_12 = arith.constant 0 : index
      %c0_13 = arith.constant 0 : index
      %c0_14 = arith.constant 0 : index
      %15 = vector.load %arg5[%c0_12, %c0_13, %c0_14] : memref<1x1x256xf32, #tpu.memory_space<vmem>>, vector<1x1x256xf32>
      tpu.vector_store %arg5[%c0_12, %c0_13, %c0_14], %14 {strides = array<i32>} : memref<1x1x256xf32, #tpu.memory_space<vmem>>, vector<1x1x256xf32>,
    } else {
    }
    %c0 = arith.constant 0 : index
    %c0_1 = arith.constant 0 : index
    %c0_2 = arith.constant 0 : index
    %3 = vector.load %arg3[%c0, %c0_1, %c0_2] : memref<1x4x256xf32, #tpu.memory_space<vmem>>, vector<1x4x256xf32>
    %4 = math.exp %3 : vector<1x4x256xf32>
    %5 = arith.mulf %4, %3 : vector<1x4x256xf32>
    %c0_3 = arith.constant 0 : index
    %c0_4 = arith.constant 0 : index
    %c0_5 = arith.constant 0 : index
    %6 = vector.load %arg5[%c0_3, %c0_4, %c0_5] : memref<1x1x256xf32, #tpu.memory_space<vmem>>, vector<1x1x256xf32>
    %cst = arith.constant dense<0.000000e+00> : vector<1x256xf32>
    %7 = vector.multi_reduction <add>, %5, %cst [1] : vector<1x4x256xf32> to vector<1x256xf32>
    %8 = vector.shape_cast %7 : vector<1x256xf32> to vector<1x1x256xf32>
    %9 = arith.addf %6, %8 : vector<1x1x256xf32>
    %c0_6 = arith.constant 0 : index
    %c0_7 = arith.constant 0 : index
    %c0_8 = arith.constant 0 : index
    %10 = vector.load %arg5[%c0_6, %c0_7, %c0_8] : memref<1x1x256xf32, #tpu.memory_space<vmem>>, vector<1x1x256xf32>
    tpu.vector_store %arg5[%c0_6, %c0_7, %c0_8], %9 {strides = array<i32>} : memref<1x1x256xf32, #tpu.memory_space<vmem>>, vector<1x1x256xf32>,
    %c0_i32_9 = arith.constant 0 : i32
    %11 = arith.cmpi eq, %arg2, %c0_i32_9 : i32
    %12 = arith.extui %11 : i1 to i32
    %c0_i32_10 = arith.constant 0 : i32
    %13 = arith.cmpi ne, %12, %c0_i32_10 : i32
    scf.if %13 {
      %c0_11 = arith.constant 0 : index
      %c0_12 = arith.constant 0 : index
      %c0_13 = arith.constant 0 : index
      %14 = vector.load %arg5[%c0_11, %c0_12, %c0_13] : memref<1x1x256xf32, #tpu.memory_space<vmem>>, vector<1x1x256xf32>
      %cst_14 = arith.constant 0.000000e+00 : f32
      %15 = vector.broadcast %cst_14 : f32 to vector<1x1x256xf32>
      %16 = arith.subf %15, %14 : vector<1x1x256xf32>
      %c0_15 = arith.constant 0 : index
      %c0_16 = arith.constant 0 : index
      %c0_17 = arith.constant 0 : index
      %17 = vector.load %arg4[%c0_15, %c0_16, %c0_17] : memref<1x1x256xf32, #tpu.memory_space<vmem>>, vector<1x1x256xf32>
      tpu.vector_store %arg4[%c0_15, %c0_16, %c0_17], %16 {strides = array<i32>} : memref<1x1x256xf32, #tpu.memory_space<vmem>>, vector<1x1x256xf32>,
    } else {
    }
    return
  }
  func.func @transform_0(%arg0: i32, %arg1: i32, %arg2: i32) -> (i32, i32, i32) {
    %c0_i32 = arith.constant 0 : i32
    return %arg0, %arg2, %arg1 : i32, i32, i32
  }
  func.func @transform_1(%arg0: i32, %arg1: i32, %arg2: i32) -> (i32, i32, i32) {
    %c0_i32 = arith.constant 0 : i32
    %c0_i32_0 = arith.constant 0 : i32
    return %arg0, %c0_i32, %arg1 : i32, i32, i32
  }
}

</mosaic_0001>

<llo_original>
// kernel: tpu_custom_call.1
$region0: #{tpu_custom_call.1}
  #allocation0 [shape = 'u32[]', space=smem, size = 0x4, offset = 0x4, fixed_abs, tag = 'smem constant byte address 0x4 - core index']
  #allocation1 [shape = 'u32[144,128]{1,0:T(1,128)}', space=vmem, size = 0x12000, scoped, tag = 'internal scratch']
  #allocation2 [shape = 'f32[1,1,256]{2,1,0:T(1,128)}', space=vmem, size = 0x400, scoped, tag = 'scratch operand']
  %s0 = inlined_call_operand.hbm [shape: f32[2,4,256], index: 0, kind: input, shape index: {}]
  %s1 = inlined_call_operand.hbm [shape: f32[2,1,256], index: 1, kind: output, shape index: {}]
  %s2 = sld [smem:[#allocation0]]
  $region49: #{tpu_custom_call.1} parent=0
    _
  %s4 = ssub.s32 1, %s2
  %s5 = scalar_select 0, %s4, %s2
  $region1: #{tpu_custom_call.1} parent=0
    #allocation3 [shape = 'u8[8192]{0}', space=vmem, size = 0x2000, scoped, tag = 'input window, operand 0']
    #allocation4 [shape = 's32[2]{0}', space=sflag, size = 0x8, scoped, tag = 'scoped memory for tpu_custom_call.1']
    #allocation5 [shape = 's32[2]{0}', space=sflag, size = 0x8, scoped, tag = 'scoped memory for tpu_custom_call.1']
    #allocation6 [shape = 'u8[2048]{0}', space=vmem, size = 0x800, scoped, tag = 'output window, operand 0']
    %6 = vsyncpa [#allocation4], 0
    %s7 = scalar_lea.sflag [#allocation4], 1
    %8 = vsyncpa %s7, 0
    %9 = vsyncpa [#allocation5], 0
    %s10 = scalar_lea.sflag [#allocation5], 1
    %11 = vsyncpa %s10, 0
    loop: start=0, step=1, limit=4
    $region2: #{tpu_custom_call.1} parent=1 // loop_pre_header
      _
    $region3: #{tpu_custom_call.1} parent=1 // loop_header
      %s13 = sphi 0, %s17
      %p14 = scmp.ge.s32.totalorder %s13, 4
      %s20 = sphi 0, %s39
      %s21 = sphi 0, %s35
      %s22 = sphi 0, %s31
      %s23 = sphi 0, %s20
      %s24 = sphi 0, %s21
      %s25 = sphi 0, %s22
      %s26 = sphi 0, %s23
      %s27 = sphi 0, %s24
      %s28 = sphi 0, %s25
      %s46 = sphi 0, %s48
      %s49 = sphi 0, %s46
      %s50 = sphi 0, %s49
      %s66 = sphi 0, %s50
      %s74 = sphi 0, %s76
      %s77 = sphi 0, %s74
      %s78 = sphi 0, %s77
      %s94 = sphi 0, %s78
    $region4: #{tpu_custom_call.1} parent=1 // loop_header_branch
      %16 = sbr.rel (%p14) target = $region8
    $region5: #{tpu_custom_call.1} parent=1 // loop_body
      %s18 = ssub.s32 %s13, 1
      %s19 = ssub.s32 %s13, 2
      %s29 = sadd.s32 1, %s22
      %p30 = scmp.ge.s32.totalorder %s29, 1
      %s31 = scalar_select %p30, 0, %s29
      %s32 = sadd.s32 1, %s21
      %s33 = scalar_select %p30, %s32, %s21
      %p34 = scmp.ge.s32.totalorder %s33, 1
      %s35 = scalar_select %p34, 0, %s33
      %s36 = sadd.s32 1, %s20
      %s37 = scalar_select %p34, %s36, %s20
      %p38 = scmp.ge.s32.totalorder %s37, 2
      %s39 = scalar_select %p38, 0, %s37
      %s40 = ssub.s32 %s20, %s39
      %s41 = ssub.s32 %s22, %s31
      %s42 = sor.u32 %s40, %s41
      %s43 = ssub.s32 %s21, %s35
      %s44 = sor.u32 %s42, %s43
      %p45 = scmp.eq.s32.totalorder %s44, 0
      %s47 = sadd.s32 %s46, 1
      %s48 = scalar_select %p45, %s46, %s47
      %p51 = pneg %p45
      %p52 = scmp.eq.s32.totalorder %s13, 1
      %p53 = por %p51, %p52
      %p54 = scmp.ne.s32.totalorder %s46, %s49
      %p55 = scmp.eq.s32.totalorder %s13, 0
      %p56 = por %p54, %p55
      %p57 = scmp.ne.s32.totalorder %s46, %s49
      %p58 = scmp.eq.s32.totalorder %s18, 1
      %p59 = por %p57, %p58
      %p60 = scmp.ne.s32.totalorder %s49, %s50
      %p61 = scmp.eq.s32.totalorder %s18, 0
      %p62 = por %p60, %p61
      %p63 = scmp.ne.s32.totalorder %s49, %s50
      %p64 = scmp.eq.s32.totalorder %s19, 1
      %p65 = por %p63, %p64
      %p67 = scmp.ne.s32.totalorder %s50, %s66
      %p68 = scmp.eq.s32.totalorder %s19, 0
      %p69 = por %p67, %p68
      %s70 = ssub.s32 %s20, %s39
      %s71 = ssub.s32 %s21, %s35
      %s72 = sor.u32 %s70, %s71
      %p73 = scmp.eq.s32.totalorder %s72, 0
      %s75 = sadd.s32 %s74, 1
      %s76 = scalar_select %p73, %s74, %s75
      %p79 = pneg %p73
      %p80 = scmp.eq.s32.totalorder %s13, 1
      %p81 = por %p79, %p80
      %p82 = scmp.ne.s32.totalorder %s74, %s77
      %p83 = scmp.eq.s32.totalorder %s13, 0
      %p84 = por %p82, %p83
      %p85 = scmp.ne.s32.totalorder %s74, %s77
      %p86 = scmp.eq.s32.totalorder %s18, 1
      %p87 = por %p85, %p86
      %p88 = scmp.ne.s32.totalorder %s77, %s78
      %p89 = scmp.eq.s32.totalorder %s18, 0
      %p90 = por %p88, %p89
      %p91 = scmp.ne.s32.totalorder %s77, %s78
      %p92 = scmp.eq.s32.totalorder %s19, 1
      %p93 = por %p91, %p92
      %p95 = scmp.ne.s32.totalorder %s78, %s94
      %p96 = scmp.eq.s32.totalorder %s19, 0
      %p97 = por %p95, %p96
      %p98 = scmp.le.s32.totalorder 1, %s13
      %p99 = scmp.lt.s32.totalorder %s13, 3
      %p100 = pnand %p98, %p99
      %p101 = pneg %p100
      // Predicated region
      $region9: #{tpu_custom_call.1} parent=5 // pred_check
        _
      $region10: #{tpu_custom_call.1} parent=5 // pred_check_branch
        %103 = sbr.rel (%p100) target = $region12
      $region11: #{tpu_custom_call.1} parent=5 // pred_region
        %s104 = ssub.s32 %s13, 1
      $region12: #{tpu_custom_call.1} parent=5 // pred_fallthru
        _
      %p105 = scmp.lt.s32.totalorder %s13, 2
      // Predicated region
      $region13: #{tpu_custom_call.1} parent=5 // pred_check
        %p106 = pneg %p105
      $region14: #{tpu_custom_call.1} parent=5 // pred_check_branch
        %108 = sbr.rel (%p106) target = $region16
      $region15: #{tpu_custom_call.1} parent=5 // pred_region
        // Predicated region
        $region17: #{tpu_custom_call.1} parent=15 // pred_check
          %p109 = pneg %p56
        $region18: #{tpu_custom_call.1} parent=15 // pred_check_branch
          %111 = sbr.rel (%p109) target = $region20
        $region19: #{tpu_custom_call.1} parent=15 // pred_region
          %s112 = sand.u32 %s46, 1
          %s113 = scalar_lea.sflag [#allocation4], %s112
          %s114 = sand.u32 %s46, 1
          %s115 = smul.addr %s114, 8
          %s116 = scalar_lea.vmem [#allocation3], %s115
          %s117 = smul.u32 2, %s21
          %s119 = ssub.s32 128, 128
          %120 = vsyncadd %s113, %s119
          %s121 = smul.addr %s22, 2
          %s122 = sadd.s32 %s117, %s121
          %s123 = smul.addr %s20, 2
          %s124 = sadd.s32 %s122, %s123
          %s125 = smul.addr %s124, 64
          %s126 = scalar_lea.hbm %s0, %s125
          %s128 = sshll.u32 %s116, 4
          %s129 = int_to_ptr.vmem [resolvable:$true] %s128
          %131 = dma.hbm_to_vmem [thread:$0]  %s126, 128, %s129, %s113
        $region20: #{tpu_custom_call.1} parent=15 // pred_fallthru
          _
      $region16: #{tpu_custom_call.1} parent=5 // pred_fallthru
        _
      %p132 = scmp.le.s32.totalorder 1, %s13
      %p133 = scmp.lt.s32.totalorder %s13, 3
      %p134 = pnand %p132, %p133
      %p135 = pneg %p134
      // Predicated region
      $region21: #{tpu_custom_call.1} parent=5 // pred_check
        _
      $region22: #{tpu_custom_call.1} parent=5 // pred_check_branch
        %137 = sbr.rel (%p134) target = $region24
      $region23: #{tpu_custom_call.1} parent=5 // pred_region
        %s138 = ssub.s32 %s13, 1
        %s139 = sand.u32 %s49, 1
        %s140 = scalar_lea.sflag [#allocation4], %s139
        %s141 = sand.u32 %s49, 1
        %s142 = smul.addr %s141, 8
        %s143 = scalar_lea.vmem [#allocation3], %s142
        // Predicated region
        $region25: #{tpu_custom_call.1} parent=23 // pred_check
          %p144 = pneg %p62
        $region26: #{tpu_custom_call.1} parent=23 // pred_check_branch
          %146 = sbr.rel (%p144) target = $region28
        $region27: #{tpu_custom_call.1} parent=23 // pred_region
          %147 = dma.done %s140, 128
        $region28: #{tpu_custom_call.1} parent=23 // pred_fallthru
          _
        %s148 = sand.u32 %s49, 1
        %s149 = scalar_lea.sflag [#allocation4], %s148
        %s150 = sand.u32 %s49, 1
        %s151 = smul.addr %s150, 8
        %s152 = scalar_lea.vmem [#allocation3], %s151
        %p153 = pneg %p62
        %p154 = pneg %p59
        %p155 = pneg %p90
        %p156 = pneg %p87
        %s157 = sand.u32 %s77, 1
        %s158 = scalar_lea.sflag [#allocation5], %s157
        %s159 = sand.u32 %s77, 1
        %s160 = smul.addr %s159, 2
        %s161 = scalar_lea.vmem [#allocation6], %s160
        %s162 = smul.u32 2, %s24
        %s163 = smul.u32 2, %s24
        %p164 = scmp.eq.s32.totalorder %s25, 0
        // Predicated region
        $region29: #{tpu_custom_call.1} parent=23 // pred_check
          %p165 = pneg %p164
        $region30: #{tpu_custom_call.1} parent=23 // pred_check_branch
          %167 = sbr.rel (%p165) target = $region32
        $region31: #{tpu_custom_call.1} parent=23 // pred_region
          %v168 = vlaneseq
          %vm169 = vcmp.ge.s32.totalorder %v168, 0
          %vm170 = vcmp.lt.s32.totalorder %v168, 256
          %vm171 = vmand %vm169, %vm170
          %172 = vst.msk [vmem:[#allocation2] sm:$0x3] %vm171, 0.0
        $region32: #{tpu_custom_call.1} parent=23 // pred_fallthru
          _
        %v173 = vld [vmem:[%s143] sm:$0xff]
        %v174 = vmul.f32 %v173, 1.442695
        %v175 = vpow.pop %v174
        %v176 = vmul.f32 %v175, %v173
        %v177 = vld [vmem:[#allocation2] sm:$0x3]
        %v179 = vcombine.high %v176, %v176
        %vm181 = vcmask 1043456
        %v182 = vsel %vm181, %v176, 0.0
        %v183 = vrot.slane %v182, 4
        %v184 = vadd.f32 %v182, %v183
        %v185 = vrot.slane %v184, 2
        %v186 = vadd.f32 %v184, %v185
        %v187 = vrot.slane %v186, 1
        %v188 = vadd.f32 %v186, %v187
        %v189 = vsel %vm181, %v179, 0.0
        %v190 = vrot.slane %v189, 4
        %v191 = vadd.f32 %v189, %v190
        %v192 = vrot.slane %v191, 2
        %v193 = vadd.f32 %v191, %v192
        %v194 = vrot.slane %v193, 1
        %v195 = vadd.f32 %v193, %v194
        %v198 = vcombine.low %v188, %v195
        %v200 = vunpack.c.l.s4 1966171168
        %v201 = vunpack.c.0.s8 %v200
        %v202 = vlaneseq
        %v203 = vshrl.u32 %v202, 7
        %v204 = vsub.s32 %v201, %v203
        %v205 = vrot.slane %v198, %v204
        %v207 = vunpack.c.l.s4 1966171168
        %v208 = vunpack.c.0.s8 %v207
        %v209 = vlaneseq
        %v210 = vshrl.u32 %v209, 7
        %v211 = vsub.s32 %v208, %v210
        %v212 = vrot.slane %v205, %v211
        %v214 = vadd.f32 %v177, %v212
        %v215 = vlaneseq
        %vm216 = vcmp.ge.s32.totalorder %v215, 0
        %vm217 = vcmp.lt.s32.totalorder %v215, 256
        %vm218 = vmand %vm216, %vm217
        %219 = vst.msk [vmem:[#allocation2] sm:$0x3] %vm218, %v214
        // Predicated region
        $region33: #{tpu_custom_call.1} parent=23 // pred_check
          %p220 = pneg %p164
        $region34: #{tpu_custom_call.1} parent=23 // pred_check_branch
          %222 = sbr.rel (%p220) target = $region36
        $region35: #{tpu_custom_call.1} parent=23 // pred_region
          %v223 = vld [vmem:[#allocation2] sm:$0x3]
          %v224 = vsub.f32 0.0, %v223
          %225 = vst.msk [vmem:[%s161] sm:$0x3] %vm218, %v224
        $region36: #{tpu_custom_call.1} parent=23 // pred_fallthru
          _
        %s226 = sand.u32 %s77, 1
        %s227 = scalar_lea.sflag [#allocation5], %s226
        %s228 = sand.u32 %s77, 1
        %s229 = smul.addr %s228, 2
        %s230 = scalar_lea.vmem [#allocation6], %s229
        // Predicated region
        $region37: #{tpu_custom_call.1} parent=23 // pred_check
          %p231 = pneg %p87
        $region38: #{tpu_custom_call.1} parent=23 // pred_check_branch
          %233 = sbr.rel (%p231) target = $region40
        $region39: #{tpu_custom_call.1} parent=23 // pred_region
          %s234 = smul.u32 2, %s24
          %s236 = ssub.s32 32, 32
          %237 = vsyncadd %s227, %s236
          %s238 = smul.addr %s23, 2
          %s239 = sadd.s32 %s234, %s238
          %s240 = smul.addr %s239, 16
          %s241 = scalar_lea.hbm %s1, %s240
          %s243 = sshll.u32 %s230, 4
          %s244 = int_to_ptr.vmem [resolvable:$true] %s243
          %246 = dma.vmem_to_hbm [thread:$0]  %s244, 32, %s241, %s227
        $region40: #{tpu_custom_call.1} parent=23 // pred_fallthru
          _
      $region24: #{tpu_custom_call.1} parent=5 // pred_fallthru
        _
      %p247 = scmp.le.s32.totalorder 2, %s13
      // Predicated region
      $region41: #{tpu_custom_call.1} parent=5 // pred_check
        %p248 = pneg %p247
      $region42: #{tpu_custom_call.1} parent=5 // pred_check_branch
        %250 = sbr.rel (%p248) target = $region44
      $region43: #{tpu_custom_call.1} parent=5 // pred_region
        %s251 = ssub.s32 %s13, 2
        // Predicated region
        $region45: #{tpu_custom_call.1} parent=43 // pred_check
          %p252 = pneg %p93
        $region46: #{tpu_custom_call.1} parent=43 // pred_check_branch
          %254 = sbr.rel (%p252) target = $region48
        $region47: #{tpu_custom_call.1} parent=43 // pred_region
          %s255 = sand.u32 %s78, 1
          %s256 = scalar_lea.sflag [#allocation5], %s255
          %s257 = sand.u32 %s78, 1
          %s258 = smul.addr %s257, 2
          %s259 = scalar_lea.vmem [#allocation6], %s258
          %260 = dma.done %s256, 32
        $region48: #{tpu_custom_call.1} parent=43 // pred_fallthru
          _
      $region44: #{tpu_custom_call.1} parent=5 // pred_fallthru
        _
    $region6: #{tpu_custom_call.1} parent=1 // loop_footer
      %s17 = sadd.s32 1, %s13
    $region7: #{tpu_custom_call.1} parent=1 // loop_footer_branch
      %12 = sbr.rel target = $region3
    $region8: #{tpu_custom_call.1} parent=1 // loop_exit
      _
    %261 = vsyncpa [#allocation4], 1
    %s262 = scalar_lea.sflag [#allocation4], 1
    %263 = vsyncpa %s262, 1
    %264 = vsyncpa [#allocation5], 1
    %s265 = scalar_lea.sflag [#allocation5], 1
    %266 = vsyncpa %s265, 1

</llo_original>
